<compile_context>
chip_gen: v7x
topology: tpu7x:2x2x1
jax: 0.10.0
libtpu: 0.0.40
codegen_flags: <defaults>
</compile_context>

<pallas_src>
import functools

import jax
import jax.numpy as jnp
from jax.experimental import pallas as pl
from jax.experimental.pallas import tpu as pltpu


def _se_kernel(x_ref, w1t_ref, w2t_ref, o_ref, *, inv_hw):
    # Squeeze: per-(batch, channel) mean over spatial. Padded lanes are zero,
    # so a plain sum divided by the *true* HW is exact.
    means = jnp.sum(x_ref[...].astype(jnp.float32), axis=-1) * inv_hw       # (Bt, C)

    # Excitation: FC1 -> ReLU -> FC2 -> sigmoid, batched over Bt so the MXU
    # lane dimension is filled instead of running 1-wide matvecs.
    y1 = jnp.dot(means, w1t_ref[...], preferred_element_type=jnp.float32)   # (Bt, Cr)
    y1 = jnp.maximum(y1, 0.0)
    y2 = jnp.dot(y1, w2t_ref[...], preferred_element_type=jnp.float32)      # (Bt, C)
    scale = jax.nn.sigmoid(y2)                                              # (Bt, C)

    # Scale: re-read x from VMEM (so the tile is not kept live in vregs across
    # the FC path) and fuse the per-channel broadcast multiply into the store.
    o_ref[...] = (x_ref[...].astype(jnp.float32) * scale[:, :, None]).astype(o_ref.dtype)


def _choose_batch_tile(B, per_batch_bytes, target_bytes=2 << 20):
    """Batch elements per grid step: aim for ~1-4 MiB tiles; prefer grid >= 2."""
    bt = int(max(1, min(B, target_bytes // max(per_batch_bytes, 1))))
    if bt >= B and B > 1:
        half = -(-B // 2)
        if half * per_batch_bytes >= (1 << 20):   # keep >= 1 MiB per step
            bt = half                              # feeds both TCs on 2-core chips
    return bt


def se_layer(x, w1, w2):
    """x: (B, C, H, W); w1: (C//r, C); w2: (C, C//r).  Returns (B, C, H, W)."""
    B, C, H, W = x.shape
    HW = H * W
    HWp = pl.cdiv(HW, 128) * 128                  # lane-dense last dim
    itemsize = jnp.dtype(x.dtype).itemsize

    x_flat = x.reshape(B, C, HW)
    if HWp != HW:
        x_flat = jnp.pad(x_flat, ((0, 0), (0, 0), (0, HWp - HW)))

    per_batch_bytes = C * HWp * itemsize
    Bt = _choose_batch_tile(B, per_batch_bytes)
    Bp = pl.cdiv(B, Bt) * Bt
    if Bp != B:                                   # pad batch; padded rows are zeros
        x_flat = jnp.pad(x_flat, ((0, Bp - B), (0, 0), (0, 0)))

    # Transposed weights so the kernel runs plain (Bt,C)@(C,Cr) / (Bt,Cr)@(Cr,C).
    w1_t = w1.T                                   # (C, Cr)
    w2_t = w2.T                                   # (Cr, C)

    tile_bytes = Bt * per_batch_bytes
    weight_bytes = int((w1.size + w2.size) * jnp.dtype(w1.dtype).itemsize)
    # Double-buffered input + output tiles + weights + headroom; stay well
    # within v7x's 64 MiB physical VMEM (and above v5e's 16 MiB default scope).
    vmem_limit = int(min(48 << 20,
                         max(4 * tile_bytes + 4 * weight_bytes + (2 << 20), 16 << 20)))

    Cr = w1.shape[0]
    cost = pl.CostEstimate(
        flops=int(2 * B * C * HW + 4 * B * C * Cr),
        transcendentals=int(B * C),
        bytes_accessed=int(2 * B * C * HW * itemsize + weight_bytes),
    )

    kernel = functools.partial(_se_kernel, inv_hw=1.0 / HW)

    out_flat = pl.pallas_call(
        kernel,
        out_shape=jax.ShapeDtypeStruct((Bp, C, HWp), x.dtype),
        grid_spec=pltpu.PrefetchScalarGridSpec(
            num_scalar_prefetch=0,
            grid=(Bp // Bt,),
            in_specs=[
                pl.BlockSpec((Bt, C, HWp), lambda b: (b, 0, 0)),
                pl.BlockSpec(w1_t.shape, lambda b: (0, 0)),
                pl.BlockSpec(w2_t.shape, lambda b: (0, 0)),
            ],
            out_specs=pl.BlockSpec((Bt, C, HWp), lambda b: (b, 0, 0)),
        ),
        compiler_params=pltpu.CompilerParams(
            dimension_semantics=("parallel",),
            vmem_limit_bytes=vmem_limit,
        ),
        cost_estimate=cost,
    )(x_flat, w1_t, w2_t)

    return out_flat[:B, :, :HW].reshape(B, C, H, W)


def se_layer_ref(x, w1, w2):
    # Pure-JAX reference mirroring the PyTorch forward.
    y = jnp.mean(x, axis=(2, 3))                  # (B, C)
    y = jnp.maximum(y @ w1.T, 0.0)                # (B, C//r)
    y = jax.nn.sigmoid(y @ w2.T)                  # (B, C)
    return x * y[:, :, None, None]


if __name__ == "__main__":
    key = jax.random.PRNGKey(0)

    # Test 1: lane-aligned spatial (HW = 256).
    B, C, H, W, reduction = 2, 64, 16, 16, 16
    Cr = C // reduction
    kx, k1, k2, key = jax.random.split(key, 4)
    x = jax.random.normal(kx, (B, C, H, W), dtype=jnp.float32)
    w1 = jax.random.normal(k1, (Cr, C), dtype=jnp.float32) * (1.0 / jnp.sqrt(C))
    w2 = jax.random.normal(k2, (C, Cr), dtype=jnp.float32) * (1.0 / jnp.sqrt(Cr))
    out = jax.block_until_ready(se_layer(x, w1, w2))
    ref = se_layer_ref(x, w1, w2)
    assert out.shape == (B, C, H, W)
    assert jnp.allclose(out, ref, atol=1e-5, rtol=1e-5)

    # Test 2: non-multiple-of-128 spatial (HW = 49) exercising the lane-padding
    # path (mean must divide by the true HW) and a batch that pads (B = 3).
    B, C, H, W, reduction = 3, 32, 7, 7, 4
    Cr = C // reduction
    kx, k1, k2, key = jax.random.split(key, 4)
    x = jax.random.normal(kx, (B, C, H, W), dtype=jnp.float32)
    w1 = jax.random.normal(k1, (Cr, C), dtype=jnp.float32) * (1.0 / jnp.sqrt(C))
    w2 = jax.random.normal(k2, (C, Cr), dtype=jnp.float32) * (1.0 / jnp.sqrt(Cr))
    out = jax.block_until_ready(se_layer(x, w1, w2))
    ref = se_layer_ref(x, w1, w2)
    assert out.shape == (B, C, H, W)
    assert jnp.allclose(out, ref, atol=1e-5, rtol=1e-5)

    print("KERNEL_OK")
</pallas_src>

<mosaic_0001>
module attributes {stable_mosaic.version = 11 : i64} {
  func.func @_se_kernel(%arg0: i32, %arg1: memref<2x64x256xf32, #tpu.memory_space<vmem>>, %arg2: memref<64x4xf32, #tpu.memory_space<vmem>>, %arg3: memref<4x64xf32, #tpu.memory_space<vmem>>, %arg4: memref<2x64x256xf32, #tpu.memory_space<vmem>>) attributes {dimension_semantics = [#tpu.dimension_semantics<parallel>], iteration_bounds = array<i64: 1>, scalar_prefetch = 0 : i64, scratch_operands = 0 : i64, tpu.core_type = #tpu.core_type<tc>, window_params = [{transform_indices = @transform_0, window_bounds = array<i64: 2, 64, 256>}, {pipeline_mode = #tpu.pipeline_mode<synchronous>, transform_indices = @transform_1, window_bounds = array<i64: 64, 4>}, {pipeline_mode = #tpu.pipeline_mode<synchronous>, transform_indices = @transform_2, window_bounds = array<i64: 4, 64>}, {transform_indices = @transform_3, window_bounds = array<i64: 2, 64, 256>}]} {
    %c0 = arith.constant 0 : index
    %c0_0 = arith.constant 0 : index
    %c0_1 = arith.constant 0 : index
    %0 = vector.load %arg1[%c0, %c0_0, %c0_1] : memref<2x64x256xf32, #tpu.memory_space<vmem>>, vector<2x64x256xf32>
    %cst = arith.constant dense<0.000000e+00> : vector<2x64xf32>
    %1 = vector.multi_reduction <add>, %0, %cst [2] : vector<2x64x256xf32> to vector<2x64xf32>
    %cst_2 = arith.constant 3.906250e-03 : f32
    %2 = vector.broadcast %cst_2 : f32 to vector<2x64xf32>
    %3 = arith.mulf %1, %2 : vector<2x64xf32>
    %c0_3 = arith.constant 0 : index
    %c0_4 = arith.constant 0 : index
    %4 = vector.load %arg2[%c0_3, %c0_4] : memref<64x4xf32, #tpu.memory_space<vmem>>, vector<64x4xf32>
    %cst_5 = arith.constant dense<0.000000e+00> : vector<2x4xf32>
    %5 = tpu.matmul %3, %4, %cst_5 {dimension_numbers = #tpu.dot_dimension_numbers<[1], [0], [0], [1], [0, 0, 1, 1], [], []>} : vector<2x64xf32>, vector<64x4xf32>, vector<2x4xf32> -> vector<2x4xf32>
    %cst_6 = arith.constant 0.000000e+00 : f32
    %6 = vector.broadcast %cst_6 : f32 to vector<2x4xf32>
    %7 = arith.maximumf %5, %6 : vector<2x4xf32>
    %c0_7 = arith.constant 0 : index
    %c0_8 = arith.constant 0 : index
    %8 = vector.load %arg3[%c0_7, %c0_8] : memref<4x64xf32, #tpu.memory_space<vmem>>, vector<4x64xf32>
    %cst_9 = arith.constant dense<0.000000e+00> : vector<2x64xf32>
    %9 = tpu.matmul %7, %8, %cst_9 {dimension_numbers = #tpu.dot_dimension_numbers<[1], [0], [0], [1], [0, 0, 1, 1], [], []>} : vector<2x4xf32>, vector<4x64xf32>, vector<2x64xf32> -> vector<2x64xf32>
    %10 = arith.negf %9 : vector<2x64xf32>
    %11 = math.exp %10 : vector<2x64xf32>
    %cst_10 = arith.constant 1.000000e+00 : f32
    %12 = vector.broadcast %cst_10 : f32 to vector<2x64xf32>
    %13 = arith.addf %12, %11 : vector<2x64xf32>
    %14 = arith.divf %12, %13 : vector<2x64xf32>
    %c0_11 = arith.constant 0 : index
    %c0_12 = arith.constant 0 : index
    %c0_13 = arith.constant 0 : index
    %15 = vector.load %arg1[%c0_11, %c0_12, %c0_13] : memref<2x64x256xf32, #tpu.memory_space<vmem>>, vector<2x64x256xf32>
    %16 = vector.shape_cast %14 : vector<2x64xf32> to vector<2x64x1xf32>
    %17 = vector.broadcast %16 : vector<2x64x1xf32> to vector<2x64x256xf32>
    %18 = arith.mulf %15, %17 : vector<2x64x256xf32>
    %c0_14 = arith.constant 0 : index
    %c0_15 = arith.constant 0 : index
    %c0_16 = arith.constant 0 : index
    %19 = vector.load %arg4[%c0_14, %c0_15, %c0_16] : memref<2x64x256xf32, #tpu.memory_space<vmem>>, vector<2x64x256xf32>
    tpu.vector_store %arg4[%c0_14, %c0_15, %c0_16], %18 {strides = array<i32>} : memref<2x64x256xf32, #tpu.memory_space<vmem>>, vector<2x64x256xf32>,
    return
  }
  func.func @transform_0(%arg0: i32) -> (i32, i32, i32) {
    %c0_i32 = arith.constant 0 : i32
    %c0_i32_0 = arith.constant 0 : i32
    %c0_i32_1 = arith.constant 0 : i32
    return %arg0, %c0_i32, %c0_i32_0 : i32, i32, i32
  }
  func.func @transform_1(%arg0: i32) -> (i32, i32) {
    %c0_i32 = arith.constant 0 : i32
    %c0_i32_0 = arith.constant 0 : i32
    %c0_i32_1 = arith.constant 0 : i32
    return %c0_i32, %c0_i32_0 : i32, i32
  }
  func.func @transform_2(%arg0: i32) -> (i32, i32) {
    %c0_i32 = arith.constant 0 : i32
    %c0_i32_0 = arith.constant 0 : i32
    %c0_i32_1 = arith.constant 0 : i32
    return %c0_i32, %c0_i32_0 : i32, i32
  }
  func.func @transform_3(%arg0: i32) -> (i32, i32, i32) {
    %c0_i32 = arith.constant 0 : i32
    %c0_i32_0 = arith.constant 0 : i32
    %c0_i32_1 = arith.constant 0 : i32
    return %arg0, %c0_i32, %c0_i32_0 : i32, i32, i32
  }
}

</mosaic_0001>

<llo_original>
// kernel: tpu_custom_call.1
$region0: #{tpu_custom_call.1}
  #allocation0 [shape = 'u32[]', space=smem, size = 0x4, offset = 0x4, fixed_abs, tag = 'smem constant byte address 0x4 - core index']
  #allocation1 [shape = 'u32[144,128]{1,0:T(1,128)}', space=vmem, size = 0x12000, scoped, tag = 'internal scratch']
  %s0 = inlined_call_operand.hbm [shape: f32[2,64,256], index: 0, kind: input, shape index: {}]
  %s1 = inlined_call_operand.vmem [shape: f32[64,4], index: 1, kind: input, shape index: {}]
  %s2 = inlined_call_operand.vmem [shape: f32[4,64], index: 2, kind: input, shape index: {}]
  %s3 = inlined_call_operand.hbm [shape: f32[2,64,256], index: 3, kind: output, shape index: {}]
  %s4 = sld [smem:[#allocation0]]
  $region26: #{tpu_custom_call.1} parent=0
    _
  %s6 = ssub.s32 1, %s4
  %s7 = scalar_select 0, %s6, %s4
  $region1: #{tpu_custom_call.1} parent=0
    #allocation2 [shape = 'u8[131072]{0}', space=vmem, size = 0x20000, scoped, tag = 'input window, operand 0, single buffered']
    #allocation3 [shape = 's32[1]{0}', space=sflag, size = 0x4, scoped, tag = 'scoped memory for tpu_custom_call.1']
    #allocation4 [shape = 's32[1]{0}', space=sflag, size = 0x4, scoped, tag = 'scoped memory for tpu_custom_call.1']
    #allocation5 [shape = 'u8[131072]{0}', space=vmem, size = 0x20000, scoped, tag = 'output window, operand 0, single buffered']
    %8 = vsyncpa [#allocation3], 0
    %9 = vsyncpa [#allocation4], 0
    // Predicated region
    $region2: #{tpu_custom_call.1} parent=1 // pred_check
      _
    $region3: #{tpu_custom_call.1} parent=1 // pred_check_branch
      %11 = sbr.rel (0) target = $region5
    $region4: #{tpu_custom_call.1} parent=1 // pred_region
      %s13 = ssub.s32 4096, 4096
      %14 = vsyncadd [#allocation3], %s13
      %s15 = sshll.u32 [#allocation2], 4
      %s16 = int_to_ptr.vmem [resolvable:$true] %s15
      %21 = dma.hbm_to_vmem [thread:$0]  %s0, 4096, %s16, [#allocation3], 256, 256, 16
    $region5: #{tpu_custom_call.1} parent=1 // pred_fallthru
      _
    // Predicated region
    $region6: #{tpu_custom_call.1} parent=1 // pred_check
      _
    $region7: #{tpu_custom_call.1} parent=1 // pred_check_branch
      %23 = sbr.rel (0) target = $region9
    $region8: #{tpu_custom_call.1} parent=1 // pred_region
      _
    $region9: #{tpu_custom_call.1} parent=1 // pred_fallthru
      _
    // Predicated region
    $region10: #{tpu_custom_call.1} parent=1 // pred_check
      _
    $region11: #{tpu_custom_call.1} parent=1 // pred_check_branch
      %25 = sbr.rel (0) target = $region13
    $region12: #{tpu_custom_call.1} parent=1 // pred_region
      _
    $region13: #{tpu_custom_call.1} parent=1 // pred_fallthru
      _
    // Predicated region
    $region14: #{tpu_custom_call.1} parent=1 // pred_check
      _
    $region15: #{tpu_custom_call.1} parent=1 // pred_check_branch
      %27 = sbr.rel (0) target = $region17
    $region16: #{tpu_custom_call.1} parent=1 // pred_region
      %28 = dma.done [#allocation3], 4096
    $region17: #{tpu_custom_call.1} parent=1 // pred_fallthru
      _
    %v29 = vld [vmem:[#allocation2] sm:$0xff]
    %v30 = vld [vmem:[#allocation2 + $0x8] sm:$0xff]
    %v31 = vld [vmem:[#allocation2 + $0x10] sm:$0xff]
    %v32 = vld [vmem:[#allocation2 + $0x18] sm:$0xff]
    %v33 = vld [vmem:[#allocation2 + $0x20] sm:$0xff]
    %v34 = vld [vmem:[#allocation2 + $0x28] sm:$0xff]
    %v35 = vld [vmem:[#allocation2 + $0x30] sm:$0xff]
    %v36 = vld [vmem:[#allocation2 + $0x38] sm:$0xff]
    %v37 = vld [vmem:[#allocation2 + $0x40] sm:$0xff]
    %v38 = vld [vmem:[#allocation2 + $0x48] sm:$0xff]
    %v39 = vld [vmem:[#allocation2 + $0x50] sm:$0xff]
    %v40 = vld [vmem:[#allocation2 + $0x58] sm:$0xff]
    %v41 = vld [vmem:[#allocation2 + $0x60] sm:$0xff]
    %v42 = vld [vmem:[#allocation2 + $0x68] sm:$0xff]
    %v43 = vld [vmem:[#allocation2 + $0x70] sm:$0xff]
    %v44 = vld [vmem:[#allocation2 + $0x78] sm:$0xff]
    %v45 = vld [vmem:[#allocation2 + $0x80] sm:$0xff]
    %v46 = vld [vmem:[#allocation2 + $0x88] sm:$0xff]
    %v47 = vld [vmem:[#allocation2 + $0x90] sm:$0xff]
    %v48 = vld [vmem:[#allocation2 + $0x98] sm:$0xff]
    %v49 = vld [vmem:[#allocation2 + $0xa0] sm:$0xff]
    %v50 = vld [vmem:[#allocation2 + $0xa8] sm:$0xff]
    %v51 = vld [vmem:[#allocation2 + $0xb0] sm:$0xff]
    %v52 = vld [vmem:[#allocation2 + $0xb8] sm:$0xff]
    %v53 = vld [vmem:[#allocation2 + $0xc0] sm:$0xff]
    %v54 = vld [vmem:[#allocation2 + $0xc8] sm:$0xff]
    %v55 = vld [vmem:[#allocation2 + $0xd0] sm:$0xff]
    %v56 = vld [vmem:[#allocation2 + $0xd8] sm:$0xff]
    %v57 = vld [vmem:[#allocation2 + $0xe0] sm:$0xff]
    %v58 = vld [vmem:[#allocation2 + $0xe8] sm:$0xff]
    %v59 = vld [vmem:[#allocation2 + $0xf0] sm:$0xff]
    %v60 = vld [vmem:[#allocation2 + $0xf8] sm:$0xff]
    %v61 = vadd.f32 %v29, %v30
    %62 = vadd.xlane.f32.xlu0 %v61
    %v63 = vpop.xlane.xlu0 %62
    %v64 = vadd.f32 %v31, %v32
    %65 = vadd.xlane.f32.xlu0 %v64
    %v66 = vpop.xlane.xlu0 %65
    %v67 = vadd.f32 %v33, %v34
    %68 = vadd.xlane.f32.xlu0 %v67
    %v69 = vpop.xlane.xlu0 %68
    %v70 = vadd.f32 %v35, %v36
    %71 = vadd.xlane.f32.xlu0 %v70
    %v72 = vpop.xlane.xlu0 %71
    %v73 = vadd.f32 %v37, %v38
    %74 = vadd.xlane.f32.xlu0 %v73
    %v75 = vpop.xlane.xlu0 %74
    %v76 = vadd.f32 %v39, %v40
    %77 = vadd.xlane.f32.xlu0 %v76
    %v78 = vpop.xlane.xlu0 %77
    %v79 = vadd.f32 %v41, %v42
    %80 = vadd.xlane.f32.xlu0 %v79
    %v81 = vpop.xlane.xlu0 %80
    %v82 = vadd.f32 %v43, %v44
    %83 = vadd.xlane.f32.xlu0 %v82
    %v84 = vpop.xlane.xlu0 %83
    %v85 = vadd.f32 %v45, %v46
    %86 = vadd.xlane.f32.xlu0 %v85
    %v87 = vpop.xlane.xlu0 %86
    %v88 = vadd.f32 %v47, %v48
    %89 = vadd.xlane.f32.xlu0 %v88
    %v90 = vpop.xlane.xlu0 %89
    %v91 = vadd.f32 %v49, %v50
    %92 = vadd.xlane.f32.xlu0 %v91
    %v93 = vpop.xlane.xlu0 %92
    %v94 = vadd.f32 %v51, %v52
    %95 = vadd.xlane.f32.xlu0 %v94
    %v96 = vpop.xlane.xlu0 %95
    %v97 = vadd.f32 %v53, %v54
    %98 = vadd.xlane.f32.xlu0 %v97
    %v99 = vpop.xlane.xlu0 %98
    %v100 = vadd.f32 %v55, %v56
    %101 = vadd.xlane.f32.xlu0 %v100
    %v102 = vpop.xlane.xlu0 %101
    %v103 = vadd.f32 %v57, %v58
    %104 = vadd.xlane.f32.xlu0 %v103
    %v105 = vpop.xlane.xlu0 %104
    %v106 = vadd.f32 %v59, %v60
    %107 = vadd.xlane.f32.xlu0 %v106
    %v108 = vpop.xlane.xlu0 %107
    %v109 = vmul.f32 %v63, 0.00390625
    %v110 = vmul.f32 %v66, 0.00390625
    %v111 = vmul.f32 %v69, 0.00390625
    %v112 = vmul.f32 %v72, 0.00390625
    %v113 = vmul.f32 %v75, 0.00390625
    %v114 = vmul.f32 %v78, 0.00390625
    %v115 = vmul.f32 %v81, 0.00390625
    %v116 = vmul.f32 %v84, 0.00390625
    %v117 = vmul.f32 %v87, 0.00390625
    %v118 = vmul.f32 %v90, 0.00390625
    %v119 = vmul.f32 %v93, 0.00390625
    %v120 = vmul.f32 %v96, 0.00390625
    %v121 = vmul.f32 %v99, 0.00390625
    %v122 = vmul.f32 %v102, 0.00390625
    %v123 = vmul.f32 %v105, 0.00390625
    %v124 = vmul.f32 %v108, 0.00390625
    %v125 = vld [vmem:[%s1] sm:$0xff]
    %v126 = vld [vmem:[%s1 + $0x8] sm:$0xff]
    %v127 = vld [vmem:[%s1 + $0x10] sm:$0xff]
    %v128 = vld [vmem:[%s1 + $0x18] sm:$0xff]
    %v129 = vld [vmem:[%s1 + $0x20] sm:$0xff]
    %v130 = vld [vmem:[%s1 + $0x28] sm:$0xff]
    %v131 = vld [vmem:[%s1 + $0x30] sm:$0xff]
    %v132 = vld [vmem:[%s1 + $0x38] sm:$0xff]
    %v149 = vlaneseq
    %v150 = vand.u32 %v149, 127
    %v151 = vlaneseq
    %v152 = vshrl.u32 %v151, 7
    %v153 = vsub.s32 %v150, %v152
    %v154 = vrot.slane %v109, %v153
    %v155 = vadd.s32 %v150, 4294967288
    %v156 = vlaneseq
    %v157 = vshrl.u32 %v156, 7
    %v158 = vsub.s32 %v155, %v157
    %v159 = vrot.slane %v110, %v158
    %vm160 = vcmask 130112
    %v161 = vsel %vm160, %v159, %v154
    %v162 = vadd.s32 %v150, 4294967280
    %v163 = vlaneseq
    %v164 = vshrl.u32 %v163, 7
    %v165 = vsub.s32 %v162, %v164
    %v166 = vrot.slane %v111, %v165
    %vm167 = vcmask 195712
    %v168 = vsel %vm167, %v166, %v161
    %v169 = vadd.s32 %v150, 4294967272
    %v170 = vlaneseq
    %v171 = vshrl.u32 %v170, 7
    %v172 = vsub.s32 %v169, %v171
    %v173 = vrot.slane %v112, %v172
    %vm174 = vcmask 261312
    %v175 = vsel %vm174, %v173, %v168
    %v176 = vadd.s32 %v150, 4294967264
    %v177 = vlaneseq
    %v178 = vshrl.u32 %v177, 7
    %v179 = vsub.s32 %v176, %v178
    %v180 = vrot.slane %v113, %v179
    %vm181 = vcmask 326912
    %v182 = vsel %vm181, %v180, %v175
    %v183 = vadd.s32 %v150, 4294967256
    %v184 = vlaneseq
    %v185 = vshrl.u32 %v184, 7
    %v186 = vsub.s32 %v183, %v185
    %v187 = vrot.slane %v114, %v186
    %vm188 = vcmask 392512
    %v189 = vsel %vm188, %v187, %v182
    %v190 = vadd.s32 %v150, 4294967248
    %v191 = vlaneseq
    %v192 = vshrl.u32 %v191, 7
    %v193 = vsub.s32 %v190, %v192
    %v194 = vrot.slane %v115, %v193
    %vm195 = vcmask 458112
    %v196 = vsel %vm195, %v194, %v189
    %v197 = vadd.s32 %v150, 4294967240
    %v198 = vlaneseq
    %v199 = vshrl.u32 %v198, 7
    %v200 = vsub.s32 %v197, %v199
    %v201 = vrot.slane %v116, %v200
    %vm202 = vcmask 523712
    %v203 = vsel %vm202, %v201, %v196
    %v204 = vlaneseq
    %v205 = vshrl.u32 %v204, 7
    %v206 = vsub.s32 %v150, %v205
    %v207 = vrot.slane %v117, %v206
    %v208 = vlaneseq
    %v209 = vshrl.u32 %v208, 7
    %v210 = vsub.s32 %v155, %v209
    %v211 = vrot.slane %v118, %v210
    %v212 = vsel %vm160, %v211, %v207
    %v213 = vlaneseq
    %v214 = vshrl.u32 %v213, 7
    %v215 = vsub.s32 %v162, %v214
    %v216 = vrot.slane %v119, %v215
    %v217 = vsel %vm167, %v216, %v212
    %v218 = vlaneseq
    %v219 = vshrl.u32 %v218, 7
    %v220 = vsub.s32 %v169, %v219
    %v221 = vrot.slane %v120, %v220
    %v222 = vsel %vm174, %v221, %v217
    %v223 = vlaneseq
    %v224 = vshrl.u32 %v223, 7
    %v225 = vsub.s32 %v176, %v224
    %v226 = vrot.slane %v121, %v225
    %v227 = vsel %vm181, %v226, %v222
    %v228 = vlaneseq
    %v229 = vshrl.u32 %v228, 7
    %v230 = vsub.s32 %v183, %v229
    %v231 = vrot.slane %v122, %v230
    %v232 = vsel %vm188, %v231, %v227
    %v233 = vlaneseq
    %v234 = vshrl.u32 %v233, 7
    %v235 = vsub.s32 %v190, %v234
    %v236 = vrot.slane %v123, %v235
    %v237 = vsel %vm195, %v236, %v232
    %v238 = vlaneseq
    %v239 = vshrl.u32 %v238, 7
    %v240 = vsub.s32 %v197, %v239
    %v241 = vrot.slane %v124, %v240
    %v242 = vsel %vm202, %v241, %v237
    %vm243 = vcmask 1041409
    %v244 = vsel %vm243, %v242, %v203
    %vm245 = vcmask 523264
    %v246 = vsel %vm245, %v244, 0
    %248 = vmatprep.subr.mxu0 0.0
    %249 = vmatpush1.msra.mxu0 %v125
    %250 = vmatprep.subr.mxu0 0.0
    %251 = vmatpush1.msra.mxu0 %v126
    %252 = vmatprep.subr.mxu0 0.0
    %253 = vmatpush1.msra.mxu0 %v127
    %254 = vmatprep.subr.mxu0 0.0
    %255 = vmatpush1.msra.mxu0 %v128
    %256 = vmatprep.subr.mxu0 0.0
    %257 = vmatpush1.msra.mxu0 %v129
    %258 = vmatprep.subr.mxu0 0.0
    %259 = vmatpush1.msra.mxu0 %v130
    %260 = vmatprep.subr.mxu0 0.0
    %261 = vmatpush1.msra.mxu0 %v131
    %262 = vmatprep.subr.mxu0 0.0
    %263 = vmatpush1.msra.mxu0 %v132
    %264 = vmatprep.subr.mxu0 0.0
    %265 = vmatpush1.msra.mxu0 0.0
    %266 = vmatprep.subr.mxu0 0.0
    %267 = vmatpush1.msra.mxu0 0.0
    %268 = vmatprep.subr.mxu0 0.0
    %269 = vmatpush1.msra.mxu0 0.0
    %270 = vmatprep.subr.mxu0 0.0
    %271 = vmatpush1.msra.mxu0 0.0
    %272 = vmatprep.subr.mxu0 0.0
    %273 = vmatpush1.msra.mxu0 0.0
    %274 = vmatprep.subr.mxu0 0.0
    %275 = vmatpush1.msra.mxu0 0.0
    %276 = vmatprep.subr.mxu0 0.0
    %277 = vmatpush1.msra.mxu0 0.0
    %278 = vmatprep.subr.mxu0 0.0
    %279 = vmatpush1.msra.mxu0 0.0
    %280 = vmatprep.subr.mxu0 0.0
    %281 = vmatpush1.msra.mxu0 0.0
    %282 = vmatprep.subr.mxu0 0.0
    %283 = vmatpush1.msra.mxu0 0.0
    %284 = vmatprep.subr.mxu0 0.0
    %285 = vmatpush1.msra.mxu0 0.0
    %286 = vmatprep.subr.mxu0 0.0
    %287 = vmatpush1.msra.mxu0 0.0
    %288 = vmatprep.subr.mxu0 0.0
    %289 = vmatpush1.msra.mxu0 0.0
    %290 = vmatprep.subr.mxu0 0.0
    %291 = vmatpush1.msra.mxu0 0.0
    %292 = vmatprep.subr.mxu0 0.0
    %293 = vmatpush1.msra.mxu0 0.0
    %294 = vmatprep.subr.mxu0 0.0
    %295 = vmatpush1.msra.mxu0 0.0
    %296 = vmatprep.subr.mxu0 0.0
    %297 = vmatpush1.msra.mxu0 0.0
    %298 = vmatprep.subr.mxu0 0.0
    %299 = vmatpush1.msra.mxu0 0.0
    %300 = vmatprep.subr.mxu0 0.0
    %301 = vmatpush1.msra.mxu0 0.0
    %302 = vmatprep.subr.mxu0 0.0
    %303 = vmatpush1.msra.mxu0 0.0
    %304 = vmatprep.subr.mxu0 0.0
    %305 = vmatpush1.msra.mxu0 0.0
    %306 = vmatprep.subr.mxu0 0.0
    %307 = vmatpush1.msra.mxu0 0.0
    %308 = vmatprep.subr.mxu0 0.0
    %309 = vmatpush1.msra.mxu0 0.0
    %310 = vmatprep.subr.mxu0 0.0
    %311 = vmatpush1.msra.mxu0 0.0
    %312 = vmatprep.mubr.f32.mxu0 0.0
    %313 = vmatmul.mubr.f32.gmra.mrb[0].mxu0 %v246
    %v314 = vpop.f32.mrb[0].mxu0
    %v315 = vadd.f32 0.0, %v314
    %v316 = vpop.f32.mrb[0].mxu0
    %317 = vdwg.mxu0
    %v318 = vmax.f32 %v315, 0.0
    %v319 = vld [vmem:[%s2] sm:$0xf]
    %vm320 = vcmask 31744
    %v322 = vsel %vm320, %v318, 0
    %vm324 = vcmask 1043456
    %v326 = vsel %vm324, %v319, 0
    %328 = vmatprep.subr.mxu0 0.0
    %329 = vmatpush1.msra.mxu0 %v326
    %330 = vmatprep.subr.mxu0 0.0
    %331 = vmatpush1.msra.mxu0 0.0
    %332 = vmatprep.subr.mxu0 0.0
    %333 = vmatpush1.msra.mxu0 0.0
    %334 = vmatprep.subr.mxu0 0.0
    %335 = vmatpush1.msra.mxu0 0.0
    %336 = vmatprep.subr.mxu0 0.0
    %337 = vmatpush1.msra.mxu0 0.0
    %338 = vmatprep.subr.mxu0 0.0
    %339 = vmatpush1.msra.mxu0 0.0
    %340 = vmatprep.subr.mxu0 0.0
    %341 = vmatpush1.msra.mxu0 0.0
    %342 = vmatprep.subr.mxu0 0.0
    %343 = vmatpush1.msra.mxu0 0.0
    %344 = vmatprep.subr.mxu0 0.0
    %345 = vmatpush1.msra.mxu0 0.0
    %346 = vmatprep.subr.mxu0 0.0
    %347 = vmatpush1.msra.mxu0 0.0
    %348 = vmatprep.subr.mxu0 0.0
    %349 = vmatpush1.msra.mxu0 0.0
    %350 = vmatprep.subr.mxu0 0.0
    %351 = vmatpush1.msra.mxu0 0.0
    %352 = vmatprep.subr.mxu0 0.0
    %353 = vmatpush1.msra.mxu0 0.0
    %354 = vmatprep.subr.mxu0 0.0
    %355 = vmatpush1.msra.mxu0 0.0
    %356 = vmatprep.subr.mxu0 0.0
    %357 = vmatpush1.msra.mxu0 0.0
    %358 = vmatprep.subr.mxu0 0.0
    %359 = vmatpush1.msra.mxu0 0.0
    %360 = vmatprep.subr.mxu0 0.0
    %361 = vmatpush1.msra.mxu0 0.0
    %362 = vmatprep.subr.mxu0 0.0
    %363 = vmatpush1.msra.mxu0 0.0
    %364 = vmatprep.subr.mxu0 0.0
    %365 = vmatpush1.msra.mxu0 0.0
    %366 = vmatprep.subr.mxu0 0.0
    %367 = vmatpush1.msra.mxu0 0.0
    %368 = vmatprep.subr.mxu0 0.0
    %369 = vmatpush1.msra.mxu0 0.0
    %370 = vmatprep.subr.mxu0 0.0
    %371 = vmatpush1.msra.mxu0 0.0
    %372 = vmatprep.subr.mxu0 0.0
    %373 = vmatpush1.msra.mxu0 0.0
    %374 = vmatprep.subr.mxu0 0.0
    %375 = vmatpush1.msra.mxu0 0.0
    %376 = vmatprep.subr.mxu0 0.0
    %377 = vmatpush1.msra.mxu0 0.0
    %378 = vmatprep.subr.mxu0 0.0
    %379 = vmatpush1.msra.mxu0 0.0
    %380 = vmatprep.subr.mxu0 0.0
    %381 = vmatpush1.msra.mxu0 0.0
    %382 = vmatprep.subr.mxu0 0.0
    %383 = vmatpush1.msra.mxu0 0.0
    %384 = vmatprep.subr.mxu0 0.0
    %385 = vmatpush1.msra.mxu0 0.0
    %386 = vmatprep.subr.mxu0 0.0
    %387 = vmatpush1.msra.mxu0 0.0
    %388 = vmatprep.subr.mxu0 0.0
    %389 = vmatpush1.msra.mxu0 0.0
    %390 = vmatprep.subr.mxu0 0.0
    %391 = vmatpush1.msra.mxu0 0.0
    %392 = vmatprep.mubr.f32.mxu0 0.0
    %393 = vmatmul.mubr.f32.gmra.mrb[0].mxu0 %v322
    %v394 = vpop.f32.mrb[0].mxu0
    %v395 = vadd.f32 0.0, %v394
    %v396 = vpop.f32.mrb[0].mxu0
    %397 = vdwg.mxu0
    %v398 = vxor.u32 %v395, 2147483648
    %v399 = vmul.f32 %v398, 1.442695
    %v400 = vpow.pop %v399
    %v401 = vadd.f32 %v400, 1.0
    %v402 = vrcp.pop %v401
    %v403 = vmul.f32 1.0, %v402
    %v404 = vlaneseq
    %v405 = vshrl.u32 %v404, 7
    %v406 = vsub.s32 0, %v405
    %v407 = vrot.slane %v403, %v406
    %409 = vbcast.lane.b32.xlu0 %v407, 256
    %v410 = vpop.permute.xlu0 %409
    %s412 = sor.u32 256, 8
    %413 = vbcast.lane.b32.xlu0 %v407, %s412
    %v414 = vpop.permute.xlu0 %413
    %s416 = sor.u32 256, 16
    %417 = vbcast.lane.b32.xlu0 %v407, %s416
    %v418 = vpop.permute.xlu0 %417
    %s420 = sor.u32 256, 24
    %421 = vbcast.lane.b32.xlu0 %v407, %s420
    %v422 = vpop.permute.xlu0 %421
    %s424 = sor.u32 256, 32
    %425 = vbcast.lane.b32.xlu0 %v407, %s424
    %v426 = vpop.permute.xlu0 %425
    %s428 = sor.u32 256, 40
    %429 = vbcast.lane.b32.xlu0 %v407, %s428
    %v430 = vpop.permute.xlu0 %429
    %s432 = sor.u32 256, 48
    %433 = vbcast.lane.b32.xlu0 %v407, %s432
    %v434 = vpop.permute.xlu0 %433
    %s436 = sor.u32 256, 56
    %437 = vbcast.lane.b32.xlu0 %v407, %s436
    %v438 = vpop.permute.xlu0 %437
    %v439 = vlaneseq
    %v440 = vshrl.u32 %v439, 7
    %v441 = vsub.s32 1, %v440
    %v442 = vrot.slane %v403, %v441
    %444 = vbcast.lane.b32.xlu0 %v442, 256
    %v445 = vpop.permute.xlu0 %444
    %s447 = sor.u32 256, 8
    %448 = vbcast.lane.b32.xlu0 %v442, %s447
    %v449 = vpop.permute.xlu0 %448
    %s451 = sor.u32 256, 16
    %452 = vbcast.lane.b32.xlu0 %v442, %s451
    %v453 = vpop.permute.xlu0 %452
    %s455 = sor.u32 256, 24
    %456 = vbcast.lane.b32.xlu0 %v442, %s455
    %v457 = vpop.permute.xlu0 %456
    %s459 = sor.u32 256, 32
    %460 = vbcast.lane.b32.xlu0 %v442, %s459
    %v461 = vpop.permute.xlu0 %460
    %s463 = sor.u32 256, 40
    %464 = vbcast.lane.b32.xlu0 %v442, %s463
    %v465 = vpop.permute.xlu0 %464
    %s467 = sor.u32 256, 48
    %468 = vbcast.lane.b32.xlu0 %v442, %s467
    %v469 = vpop.permute.xlu0 %468
    %s471 = sor.u32 256, 56
    %472 = vbcast.lane.b32.xlu0 %v442, %s471
    %v473 = vpop.permute.xlu0 %472
    %v474 = vmul.f32 %v29, %v410
    %v475 = vmul.f32 %v30, %v410
    %v476 = vmul.f32 %v31, %v414
    %v477 = vmul.f32 %v32, %v414
    %v478 = vmul.f32 %v33, %v418
    %v479 = vmul.f32 %v34, %v418
    %v480 = vmul.f32 %v35, %v422
    %v481 = vmul.f32 %v36, %v422
    %v482 = vmul.f32 %v37, %v426
    %v483 = vmul.f32 %v38, %v426
    %v484 = vmul.f32 %v39, %v430
    %v485 = vmul.f32 %v40, %v430
    %v486 = vmul.f32 %v41, %v434
    %v487 = vmul.f32 %v42, %v434
    %v488 = vmul.f32 %v43, %v438
    %v489 = vmul.f32 %v44, %v438
    %v490 = vmul.f32 %v45, %v445
    %v491 = vmul.f32 %v46, %v445
    %v492 = vmul.f32 %v47, %v449
    %v493 = vmul.f32 %v48, %v449
    %v494 = vmul.f32 %v49, %v453
    %v495 = vmul.f32 %v50, %v453
    %v496 = vmul.f32 %v51, %v457
    %v497 = vmul.f32 %v52, %v457
    %v498 = vmul.f32 %v53, %v461
    %v499 = vmul.f32 %v54, %v461
    %v500 = vmul.f32 %v55, %v465
    %v501 = vmul.f32 %v56, %v465
    %v502 = vmul.f32 %v57, %v469
    %v503 = vmul.f32 %v58, %v469
    %v504 = vmul.f32 %v59, %v473
    %v505 = vmul.f32 %v60, %v473
    %506 = vst [vmem:[#allocation5] sm:$0xff] %v474
    %507 = vst [vmem:[#allocation5 + $0x8] sm:$0xff] %v475
    %508 = vst [vmem:[#allocation5 + $0x10] sm:$0xff] %v476
    %509 = vst [vmem:[#allocation5 + $0x18] sm:$0xff] %v477
    %510 = vst [vmem:[#allocation5 + $0x20] sm:$0xff] %v478
    %511 = vst [vmem:[#allocation5 + $0x28] sm:$0xff] %v479
    %512 = vst [vmem:[#allocation5 + $0x30] sm:$0xff] %v480
    %513 = vst [vmem:[#allocation5 + $0x38] sm:$0xff] %v481
    %514 = vst [vmem:[#allocation5 + $0x40] sm:$0xff] %v482
    %515 = vst [vmem:[#allocation5 + $0x48] sm:$0xff] %v483
    %516 = vst [vmem:[#allocation5 + $0x50] sm:$0xff] %v484
    %517 = vst [vmem:[#allocation5 + $0x58] sm:$0xff] %v485
    %518 = vst [vmem:[#allocation5 + $0x60] sm:$0xff] %v486
    %519 = vst [vmem:[#allocation5 + $0x68] sm:$0xff] %v487
    %520 = vst [vmem:[#allocation5 + $0x70] sm:$0xff] %v488
    %521 = vst [vmem:[#allocation5 + $0x78] sm:$0xff] %v489
    %522 = vst [vmem:[#allocation5 + $0x80] sm:$0xff] %v490
    %523 = vst [vmem:[#allocation5 + $0x88] sm:$0xff] %v491
    %524 = vst [vmem:[#allocation5 + $0x90] sm:$0xff] %v492
    %525 = vst [vmem:[#allocation5 + $0x98] sm:$0xff] %v493
    %526 = vst [vmem:[#allocation5 + $0xa0] sm:$0xff] %v494
    %527 = vst [vmem:[#allocation5 + $0xa8] sm:$0xff] %v495
    %528 = vst [vmem:[#allocation5 + $0xb0] sm:$0xff] %v496
    %529 = vst [vmem:[#allocation5 + $0xb8] sm:$0xff] %v497
    %530 = vst [vmem:[#allocation5 + $0xc0] sm:$0xff] %v498
    %531 = vst [vmem:[#allocation5 + $0xc8] sm:$0xff] %v499
    %532 = vst [vmem:[#allocation5 + $0xd0] sm:$0xff] %v500
    %533 = vst [vmem:[#allocation5 + $0xd8] sm:$0xff] %v501
    %534 = vst [vmem:[#allocation5 + $0xe0] sm:$0xff] %v502
    %535 = vst [vmem:[#allocation5 + $0xe8] sm:$0xff] %v503
    %536 = vst [vmem:[#allocation5 + $0xf0] sm:$0xff] %v504
    %537 = vst [vmem:[#allocation5 + $0xf8] sm:$0xff] %v505
    // Predicated region
    $region18: #{tpu_custom_call.1} parent=1 // pred_check
      _
    $region19: #{tpu_custom_call.1} parent=1 // pred_check_branch
      %539 = sbr.rel (0) target = $region21
    $region20: #{tpu_custom_call.1} parent=1 // pred_region
      %s541 = ssub.s32 4096, 4096
      %542 = vsyncadd [#allocation4], %s541
      %s543 = sshll.u32 [#allocation5], 4
      %s544 = int_to_ptr.vmem [resolvable:$true] %s543
      %549 = dma.vmem_to_hbm [thread:$0]  %s544, 4096, %s3, [#allocation4], 256, 256, 16
    $region21: #{tpu_custom_call.1} parent=1 // pred_fallthru
      _
    // Predicated region
    $region22: #{tpu_custom_call.1} parent=1 // pred_check
      _
    $region23: #{tpu_custom_call.1} parent=1 // pred_check_branch
      %551 = sbr.rel (0) target = $region25
    $region24: #{tpu_custom_call.1} parent=1 // pred_region
      %552 = dma.done [#allocation4], 4096
    $region25: #{tpu_custom_call.1} parent=1 // pred_fallthru
      _
    %553 = vsyncpa [#allocation3], 1
    %554 = vsyncpa [#allocation4], 1

</llo_original>
